<compile_context>
chip_gen: v7x
topology: tpu7x:2x2x1
jax: 0.10.0
libtpu: 0.0.40
codegen_flags: <defaults>
</compile_context>

<pallas_src>
import functools

import jax
import jax.numpy as jnp
from jax import lax
from jax.experimental import pallas as pl
from jax.experimental.pallas import tpu as pltpu


def _round_up(v, m):
    return ((v + m - 1) // m) * m


def _segment_sum_kernel(idx_ref, x_ref, o_ref, acc_ref, *, dst_size, n_valid, tn):
    # Grid: (D tiles ["parallel"], N chunks ["arbitrary", reduction, last]).
    k = pl.program_id(1)

    @pl.when(k == 0)
    def _():
        acc_ref[...] = jnp.zeros_like(acc_ref)

    idx = idx_ref[...]                                   # (1, tn) int32, lane-dense
    # One-hot built directly in (dst_size, tn) orientation -> feeds MXU as the
    # lhs of a plain [M,K]@[K,N] matmul (no XLU transpose). Padded idx entries
    # carry dst_size (out of range) -> all-zero one-hot column.
    seg = lax.broadcasted_iota(jnp.int32, (dst_size, tn), 0)
    onehot = (seg == idx).astype(x_ref.dtype)            # 0/1 exact in bf16/f32

    x = x_ref[...]                                       # (tn, td), native dtype
    if n_valid % tn != 0:
        # Ragged tail N-block: rows >= n_valid were never written in HBM ->
        # explicitly zero them (0 * uninitialized could be NaN/Inf).
        row = k * tn + lax.broadcasted_iota(jnp.int32, (tn, 1), 0)
        x = jnp.where(row < n_valid, x, jnp.zeros_like(x))

    acc_ref[...] += jnp.dot(onehot, x, preferred_element_type=jnp.float32)

    @pl.when(k == pl.num_programs(1) - 1)
    def _():
        o_ref[...] = acc_ref[...].astype(o_ref.dtype)


def sum_pooling(x, dst_idx, dst_size, *, tn=256):
    """Pallas segment_sum: out[dst_idx[i]] += x[i]; out leading dim = dst_size."""
    orig_shape = x.shape
    n = orig_shape[0]
    d = 1
    for s in orig_shape[1:]:
        d *= s
    x2 = x.reshape(n, d)                                 # feature dim -> lanes

    # --- N (reduction) chunking -------------------------------------------
    # tn must be a multiple of 128 when there are multiple N blocks (lane-dense
    # idx row); clamp for tiny N so a single full-extent block is used.
    tn = max(128, _round_up(tn, 128))
    tn_eff = min(tn, _round_up(max(n, 1), 8))
    n_total = _round_up(n, tn_eff)

    # Only the tiny index vector is padded in HBM; x is NOT copied.
    dst_idx = dst_idx.astype(jnp.int32)
    n_pad = n_total - n
    if n_pad:
        dst_idx = jnp.concatenate(
            [dst_idx, jnp.full((n_pad,), dst_size, jnp.int32)], axis=0)
    idx_row = dst_idx.reshape(1, n_total)                # lane-major index row

    # --- D (feature) tiling -------------------------------------------------
    if d % 128 == 0:
        # Lane-aligned: tile D; keep the f32 accumulator roughly <= 8 MiB.
        td_cap = max(128, ((8 * 2**20) // (4 * dst_size)) // 128 * 128)
        td = min(d, 512, td_cap)
    else:
        td = d                                           # full-extent block
    grid = (pl.cdiv(d, td), n_total // tn_eff)

    # --- VMEM budget --------------------------------------------------------
    itemsize = x2.dtype.itemsize
    est = (dst_size * td * 4                             # f32 accumulator
           + 2 * dst_size * td * itemsize                # output (dbl-buffered)
           + 2 * tn_eff * td * itemsize                  # x tiles (dbl-buffered)
           + 2 * tn_eff * 4)                             # idx tiles
    vmem_limit = int(min(64 * 2**20, max(32 * 2**20, 2 * est)))

    kernel = functools.partial(
        _segment_sum_kernel, dst_size=dst_size, n_valid=n, tn=tn_eff)

    out = pl.pallas_call(
        kernel,
        out_shape=jax.ShapeDtypeStruct((dst_size, d), x.dtype),
        grid_spec=pltpu.PrefetchScalarGridSpec(
            num_scalar_prefetch=0,
            grid=grid,
            in_specs=[
                pl.BlockSpec((1, tn_eff), lambda j, k: (0, k)),    # idx row
                pl.BlockSpec((tn_eff, td), lambda j, k: (k, j)),   # x rows
            ],
            out_specs=pl.BlockSpec((dst_size, td), lambda j, k: (0, j)),
            scratch_shapes=[pltpu.VMEM((dst_size, td), jnp.float32)],
        ),
        compiler_params=pltpu.CompilerParams(
            dimension_semantics=("parallel", "arbitrary"),
            vmem_limit_bytes=vmem_limit,
        ),
    )(idx_row, x2)

    return out.reshape((dst_size,) + orig_shape[1:])


if __name__ == "__main__":
    key = jax.random.PRNGKey(0)
    k1, k2, k3, k4 = jax.random.split(key, 4)

    # --- Test 1: small f32 case matching SumPooling.forward(x, dst_idx, dst_size)
    N, D, DST = 16, 32, 8
    x = jax.random.normal(k1, (N, D), dtype=jnp.float32)
    dst_idx = jax.random.randint(k2, (N,), 0, DST, dtype=jnp.int32)

    out = sum_pooling(x, dst_idx, DST)
    out = jax.block_until_ready(out)
    ref = jax.ops.segment_sum(x, dst_idx, num_segments=DST)
    assert out.shape == (DST, D)
    assert jnp.allclose(out, ref, atol=1e-5, rtol=1e-5)

    # --- Test 2: bf16, multi-chunk N with ragged tail (exercises masking path)
    N2, D2, DST2 = 300, 128, 16
    x2 = jax.random.normal(k3, (N2, D2), dtype=jnp.float32).astype(jnp.bfloat16)
    dst_idx2 = jax.random.randint(k4, (N2,), 0, DST2, dtype=jnp.int32)

    out2 = sum_pooling(x2, dst_idx2, DST2)
    out2 = jax.block_until_ready(out2)
    ref2 = jax.ops.segment_sum(x2.astype(jnp.float32), dst_idx2, num_segments=DST2)
    assert out2.shape == (DST2, D2)
    assert jnp.allclose(out2.astype(jnp.float32), ref2, atol=5e-2, rtol=2e-2)

    print("KERNEL_OK")
</pallas_src>

<mosaic_0001>
module attributes {stable_mosaic.version = 11 : i64} {
  func.func @_segment_sum_kernel(%arg0: i32, %arg1: i32, %arg2: memref<1x16xi32, #tpu.memory_space<vmem>>, %arg3: memref<16x32xf32, #tpu.memory_space<vmem>>, %arg4: memref<8x32xf32, #tpu.memory_space<vmem>>, %arg5: memref<8x32xf32, #tpu.memory_space<vmem>>) attributes {dimension_semantics = [#tpu.dimension_semantics<parallel>, #tpu.dimension_semantics<arbitrary>], iteration_bounds = array<i64: 1, 1>, scalar_prefetch = 0 : i64, scratch_operands = 1 : i64, tpu.core_type = #tpu.core_type<tc>, window_params = [{transform_indices = @transform_0, window_bounds = array<i64: 1, 16>}, {transform_indices = @transform_1, window_bounds = array<i64: 16, 32>}, {transform_indices = @transform_2, window_bounds = array<i64: 8, 32>}]} {
    %c0_i32 = arith.constant 0 : i32
    %0 = arith.cmpi eq, %arg1, %c0_i32 : i32
    %1 = arith.extui %0 : i1 to i32
    %c0_i32_0 = arith.constant 0 : i32
    %2 = arith.cmpi ne, %1, %c0_i32_0 : i32
    scf.if %2 {
      %cst_10 = arith.constant 0.000000e+00 : f32
      %17 = vector.broadcast %cst_10 : f32 to vector<8x32xf32>
      %c0_11 = arith.constant 0 : index
      %c0_12 = arith.constant 0 : index
      %18 = vector.load %arg5[%c0_11, %c0_12] : memref<8x32xf32, #tpu.memory_space<vmem>>, vector<8x32xf32>
      tpu.vector_store %arg5[%c0_11, %c0_12], %17 {strides = array<i32>} : memref<8x32xf32, #tpu.memory_space<vmem>>, vector<8x32xf32>,
    } else {
    }
    %c0 = arith.constant 0 : index
    %c0_1 = arith.constant 0 : index
    %3 = vector.load %arg2[%c0, %c0_1] : memref<1x16xi32, #tpu.memory_space<vmem>>, vector<1x16xi32>
    %4 = tpu.iota {dimensions = array<i32: 0>} : vector<8x16xi32>
    %5 = vector.broadcast %3 : vector<1x16xi32> to vector<8x16xi32>
    %6 = arith.cmpi eq, %4, %5 : vector<8x16xi32>
    %7 = arith.extui %6 : vector<8x16xi1> to vector<8x16xi32>
    %8 = arith.sitofp %7 : vector<8x16xi32> to vector<8x16xf32>
    %c0_2 = arith.constant 0 : index
    %c0_3 = arith.constant 0 : index
    %9 = vector.load %arg3[%c0_2, %c0_3] : memref<16x32xf32, #tpu.memory_space<vmem>>, vector<16x32xf32>
    %c0_4 = arith.constant 0 : index
    %c0_5 = arith.constant 0 : index
    %10 = vector.load %arg5[%c0_4, %c0_5] : memref<8x32xf32, #tpu.memory_space<vmem>>, vector<8x32xf32>
    %cst = arith.constant dense<0.000000e+00> : vector<8x32xf32>
    %11 = tpu.matmul %8, %9, %cst {dimension_numbers = #tpu.dot_dimension_numbers<[1], [0], [0], [1], [0, 0, 1, 1], [], []>} : vector<8x16xf32>, vector<16x32xf32>, vector<8x32xf32> -> vector<8x32xf32>
    %12 = arith.addf %10, %11 : vector<8x32xf32>
    %c0_6 = arith.constant 0 : index
    %c0_7 = arith.constant 0 : index
    %13 = vector.load %arg5[%c0_6, %c0_7] : memref<8x32xf32, #tpu.memory_space<vmem>>, vector<8x32xf32>
    tpu.vector_store %arg5[%c0_6, %c0_7], %12 {strides = array<i32>} : memref<8x32xf32, #tpu.memory_space<vmem>>, vector<8x32xf32>,
    %c0_i32_8 = arith.constant 0 : i32
    %14 = arith.cmpi eq, %arg1, %c0_i32_8 : i32
    %15 = arith.extui %14 : i1 to i32
    %c0_i32_9 = arith.constant 0 : i32
    %16 = arith.cmpi ne, %15, %c0_i32_9 : i32
    scf.if %16 {
      %c0_10 = arith.constant 0 : index
      %c0_11 = arith.constant 0 : index
      %17 = vector.load %arg5[%c0_10, %c0_11] : memref<8x32xf32, #tpu.memory_space<vmem>>, vector<8x32xf32>
      %c0_12 = arith.constant 0 : index
      %c0_13 = arith.constant 0 : index
      %18 = vector.load %arg4[%c0_12, %c0_13] : memref<8x32xf32, #tpu.memory_space<vmem>>, vector<8x32xf32>
      tpu.vector_store %arg4[%c0_12, %c0_13], %17 {strides = array<i32>} : memref<8x32xf32, #tpu.memory_space<vmem>>, vector<8x32xf32>,
    } else {
    }
    return
  }
  func.func @transform_0(%arg0: i32, %arg1: i32) -> (i32, i32) {
    %c0_i32 = arith.constant 0 : i32
    %c0_i32_0 = arith.constant 0 : i32
    return %c0_i32, %arg1 : i32, i32
  }
  func.func @transform_1(%arg0: i32, %arg1: i32) -> (i32, i32) {
    %c0_i32 = arith.constant 0 : i32
    return %arg1, %arg0 : i32, i32
  }
  func.func @transform_2(%arg0: i32, %arg1: i32) -> (i32, i32) {
    %c0_i32 = arith.constant 0 : i32
    %c0_i32_0 = arith.constant 0 : i32
    return %c0_i32, %arg0 : i32, i32
  }
}

</mosaic_0001>

<llo_original>
// kernel: tpu_custom_call.1
$region0: #{tpu_custom_call.1}
  #allocation0 [shape = 'u32[]', space=smem, size = 0x4, offset = 0x4, fixed_abs, tag = 'smem constant byte address 0x4 - core index']
  #allocation1 [shape = 'u32[144,128]{1,0:T(1,128)}', space=vmem, size = 0x12000, scoped, tag = 'internal scratch']
  #allocation2 [shape = 'f32[8,32]{1,0:T(8,128)}', space=vmem, size = 0x1000, scoped, tag = 'scratch operand']
  %s0 = inlined_call_operand.hbm [shape: s32[1,16], index: 0, kind: input, shape index: {}]
  %s1 = inlined_call_operand.hbm [shape: f32[16,32], index: 1, kind: input, shape index: {}]
  %s2 = inlined_call_operand.hbm [shape: f32[8,32], index: 2, kind: output, shape index: {}]
  %s3 = sld [smem:[#allocation0]]
  $region34: #{tpu_custom_call.1} parent=0
    _
  %s5 = ssub.s32 1, %s3
  %s6 = scalar_select 0, %s5, %s3
  $region1: #{tpu_custom_call.1} parent=0
    #allocation3 [shape = 'u8[512]{0}', space=vmem, size = 0x400, scoped, tag = 'input window, operand 0, single buffered']
    #allocation4 [shape = 's32[1]{0}', space=sflag, size = 0x4, scoped, tag = 'scoped memory for tpu_custom_call.1']
    #allocation5 [shape = 's32[1]{0}', space=sflag, size = 0x4, scoped, tag = 'scoped memory for tpu_custom_call.1']
    #allocation6 [shape = 'u8[8192]{0}', space=vmem, size = 0x2000, scoped, tag = 'input window, operand 1, single buffered']
    #allocation7 [shape = 's32[1]{0}', space=sflag, size = 0x4, scoped, tag = 'scoped memory for tpu_custom_call.1']
    #allocation8 [shape = 'u8[4096]{0}', space=vmem, size = 0x1000, scoped, tag = 'output window, operand 0, single buffered']
    %7 = vsyncpa [#allocation4], 0
    %8 = vsyncpa [#allocation7], 0
    %9 = vsyncpa [#allocation5], 0
    // Predicated region
    $region2: #{tpu_custom_call.1} parent=1 // pred_check
      _
    $region3: #{tpu_custom_call.1} parent=1 // pred_check_branch
      %11 = sbr.rel (0) target = $region5
    $region4: #{tpu_custom_call.1} parent=1 // pred_region
      %s13 = ssub.s32 16, 16
      %14 = vsyncadd [#allocation4], %s13
      %s16 = sshll.u32 [#allocation3], 4
      %s17 = int_to_ptr.vmem [resolvable:$true] %s16
      %19 = dma.hbm_to_vmem [thread:$0]  %s0, 16, %s17, [#allocation4]
    $region5: #{tpu_custom_call.1} parent=1 // pred_fallthru
      _
    // Predicated region
    $region6: #{tpu_custom_call.1} parent=1 // pred_check
      _
    $region7: #{tpu_custom_call.1} parent=1 // pred_check_branch
      %21 = sbr.rel (0) target = $region9
    $region8: #{tpu_custom_call.1} parent=1 // pred_region
      %s23 = ssub.s32 256, 256
      %24 = vsyncadd [#allocation7], %s23
      %s25 = sshll.u32 [#allocation6], 4
      %s26 = int_to_ptr.vmem [resolvable:$true] %s25
      %31 = dma.hbm_to_vmem [thread:$0]  %s1, 256, %s26, [#allocation7], 128, 128, 8
    $region9: #{tpu_custom_call.1} parent=1 // pred_fallthru
      _
    // Predicated region
    $region10: #{tpu_custom_call.1} parent=1 // pred_check
      _
    $region11: #{tpu_custom_call.1} parent=1 // pred_check_branch
      %33 = sbr.rel (0) target = $region13
    $region12: #{tpu_custom_call.1} parent=1 // pred_region
      %34 = dma.done [#allocation4], 16
    $region13: #{tpu_custom_call.1} parent=1 // pred_fallthru
      _
    // Predicated region
    $region14: #{tpu_custom_call.1} parent=1 // pred_check
      _
    $region15: #{tpu_custom_call.1} parent=1 // pred_check_branch
      %36 = sbr.rel (0) target = $region17
    $region16: #{tpu_custom_call.1} parent=1 // pred_region
      %37 = dma.done [#allocation7], 256
    $region17: #{tpu_custom_call.1} parent=1 // pred_fallthru
      _
    %p38 = scmp.eq.s32.totalorder 0, 0
    // Predicated region
    $region18: #{tpu_custom_call.1} parent=1 // pred_check
      %p39 = pneg %p38
    $region19: #{tpu_custom_call.1} parent=1 // pred_check_branch
      %41 = sbr.rel (%p39) target = $region21
    $region20: #{tpu_custom_call.1} parent=1 // pred_region
      %vm42 = vcmask 261120
      %43 = vst.msk [vmem:[#allocation2] sm:$0xff] %vm42, 0.0
    $region21: #{tpu_custom_call.1} parent=1 // pred_fallthru
      _
    %v44 = vld [vmem:[#allocation3] sm:$0x1]
    %v45 = vlaneseq
    %v46 = vshrl.u32 %v45, 7
    %v47 = vlaneseq
    %v48 = vshrl.u32 %v47, 7
    %v49 = vsub.s32 0, %v48
    %v50 = vrot.slane %v44, %v49
    %vm51 = vcmp.eq.s32.totalorder %v46, %v50
    %v52 = vsel %vm51, 1, 0
    %v53 = vcvt.s32.f32 %v52
    %v54 = vld [vmem:[#allocation6] sm:$0xff]
    %v55 = vld [vmem:[#allocation6 + $0x8] sm:$0xff]
    %v56 = vld [vmem:[#allocation2] sm:$0xff]
    %vm57 = vcmask 130048
    %v59 = vsel %vm57, %v53, 0
    %61 = vmatprep.subr.mxu0 0.0
    %62 = vmatpush1.msra.mxu0 %v54
    %63 = vmatprep.subr.mxu0 0.0
    %64 = vmatpush1.msra.mxu0 %v55
    %65 = vmatprep.subr.mxu0 0.0
    %66 = vmatpush1.msra.mxu0 0.0
    %67 = vmatprep.subr.mxu0 0.0
    %68 = vmatpush1.msra.mxu0 0.0
    %69 = vmatprep.subr.mxu0 0.0
    %70 = vmatpush1.msra.mxu0 0.0
    %71 = vmatprep.subr.mxu0 0.0
    %72 = vmatpush1.msra.mxu0 0.0
    %73 = vmatprep.subr.mxu0 0.0
    %74 = vmatpush1.msra.mxu0 0.0
    %75 = vmatprep.subr.mxu0 0.0
    %76 = vmatpush1.msra.mxu0 0.0
    %77 = vmatprep.subr.mxu0 0.0
    %78 = vmatpush1.msra.mxu0 0.0
    %79 = vmatprep.subr.mxu0 0.0
    %80 = vmatpush1.msra.mxu0 0.0
    %81 = vmatprep.subr.mxu0 0.0
    %82 = vmatpush1.msra.mxu0 0.0
    %83 = vmatprep.subr.mxu0 0.0
    %84 = vmatpush1.msra.mxu0 0.0
    %85 = vmatprep.subr.mxu0 0.0
    %86 = vmatpush1.msra.mxu0 0.0
    %87 = vmatprep.subr.mxu0 0.0
    %88 = vmatpush1.msra.mxu0 0.0
    %89 = vmatprep.subr.mxu0 0.0
    %90 = vmatpush1.msra.mxu0 0.0
    %91 = vmatprep.subr.mxu0 0.0
    %92 = vmatpush1.msra.mxu0 0.0
    %93 = vmatprep.subr.mxu0 0.0
    %94 = vmatpush1.msra.mxu0 0.0
    %95 = vmatprep.subr.mxu0 0.0
    %96 = vmatpush1.msra.mxu0 0.0
    %97 = vmatprep.subr.mxu0 0.0
    %98 = vmatpush1.msra.mxu0 0.0
    %99 = vmatprep.subr.mxu0 0.0
    %100 = vmatpush1.msra.mxu0 0.0
    %101 = vmatprep.subr.mxu0 0.0
    %102 = vmatpush1.msra.mxu0 0.0
    %103 = vmatprep.subr.mxu0 0.0
    %104 = vmatpush1.msra.mxu0 0.0
    %105 = vmatprep.subr.mxu0 0.0
    %106 = vmatpush1.msra.mxu0 0.0
    %107 = vmatprep.subr.mxu0 0.0
    %108 = vmatpush1.msra.mxu0 0.0
    %109 = vmatprep.subr.mxu0 0.0
    %110 = vmatpush1.msra.mxu0 0.0
    %111 = vmatprep.subr.mxu0 0.0
    %112 = vmatpush1.msra.mxu0 0.0
    %113 = vmatprep.subr.mxu0 0.0
    %114 = vmatpush1.msra.mxu0 0.0
    %115 = vmatprep.subr.mxu0 0.0
    %116 = vmatpush1.msra.mxu0 0.0
    %117 = vmatprep.subr.mxu0 0.0
    %118 = vmatpush1.msra.mxu0 0.0
    %119 = vmatprep.subr.mxu0 0.0
    %120 = vmatpush1.msra.mxu0 0.0
    %121 = vmatprep.subr.mxu0 0.0
    %122 = vmatpush1.msra.mxu0 0.0
    %123 = vmatprep.subr.mxu0 0.0
    %124 = vmatpush1.msra.mxu0 0.0
    %125 = vmatprep.mubr.f32.mxu0 0.0
    %126 = vmatmul.mubr.f32.gmra.mrb[0].mxu0 %v59
    %v127 = vpop.f32.mrb[0].mxu0
    %v128 = vadd.f32 0.0, %v127
    %v129 = vpop.f32.mrb[0].mxu0
    %130 = vdwg.mxu0
    %v131 = vadd.f32 %v56, %v128
    %vm132 = vcmask 261120
    %133 = vst.msk [vmem:[#allocation2] sm:$0xff] %vm132, %v131
    // Predicated region
    $region22: #{tpu_custom_call.1} parent=1 // pred_check
      %p134 = pneg %p38
    $region23: #{tpu_custom_call.1} parent=1 // pred_check_branch
      %136 = sbr.rel (%p134) target = $region25
    $region24: #{tpu_custom_call.1} parent=1 // pred_region
      %v137 = vld [vmem:[#allocation2] sm:$0xff]
      %138 = vst.msk [vmem:[#allocation8] sm:$0xff] %vm132, %v137
    $region25: #{tpu_custom_call.1} parent=1 // pred_fallthru
      _
    // Predicated region
    $region26: #{tpu_custom_call.1} parent=1 // pred_check
      _
    $region27: #{tpu_custom_call.1} parent=1 // pred_check_branch
      %140 = sbr.rel (0) target = $region29
    $region28: #{tpu_custom_call.1} parent=1 // pred_region
      %s142 = ssub.s32 128, 128
      %143 = vsyncadd [#allocation5], %s142
      %s145 = sshll.u32 [#allocation8], 4
      %s146 = int_to_ptr.vmem [resolvable:$true] %s145
      %148 = dma.vmem_to_hbm [thread:$0]  %s146, 128, %s2, [#allocation5]
    $region29: #{tpu_custom_call.1} parent=1 // pred_fallthru
      _
    // Predicated region
    $region30: #{tpu_custom_call.1} parent=1 // pred_check
      _
    $region31: #{tpu_custom_call.1} parent=1 // pred_check_branch
      %150 = sbr.rel (0) target = $region33
    $region32: #{tpu_custom_call.1} parent=1 // pred_region
      %151 = dma.done [#allocation5], 128
    $region33: #{tpu_custom_call.1} parent=1 // pred_fallthru
      _
    %152 = vsyncpa [#allocation4], 1
    %153 = vsyncpa [#allocation7], 1
    %154 = vsyncpa [#allocation5], 1

</llo_original>
